<compile_context>
chip_gen: v6e
topology: v6e:2x2x1
jax: 0.10.0
libtpu: 0.0.40
codegen_flags: <defaults>
</compile_context>

<pallas_src>
import functools

import jax
import jax.numpy as jnp
from jax import lax
from jax.experimental import pallas as pl
from jax.experimental.pallas import tpu as pltpu

_LANES = 128
_SUBLANES = 8
# ~2 MiB per input per grid step: 4096 f32 rows / 8192 bf16 rows.  Two inputs,
# double-buffered -> 8 MiB of VMEM, comfortably inside the default scoped
# budget on v5e (16 MiB) and v6e/v7x (32 MiB).
_TARGET_BLOCK_BYTES = 2 * 1024 * 1024


def _dual_tensorcore() -> bool:
    """True on chips exposing 2 TensorCores per device (v7x)."""
    # TODO(synk): verify the device_kind string on real v7x hardware; on any
    # mismatch we safely fall back to the single-core layout.
    try:
        return "v7" in jax.devices()[0].device_kind.lower()
    except Exception:
        return False


def _symlog(t):
    """sign(t) * log(|t| + 1), with the sign moved via a bit transfer.

    `t` must already be float32.  Two cheap VPU bit-ops replace the
    compare/select/multiply chain that jnp.sign() lowers to; log1p goes to the
    EUP (its own issue slot) so it is essentially free on this HBM-bound kernel.
    """
    mag = jnp.log1p(jnp.abs(t))
    sign_bit = pltpu.bitcast(t, jnp.uint32) & jnp.uint32(0x80000000)
    return pltpu.bitcast(pltpu.bitcast(mag, jnp.uint32) | sign_bit, jnp.float32)


def _sse_kernel(x_ref, t_ref, out_ref, acc_ref, *,
                block_rows, bps, num_blocks, edge_valid_rows, has_dup):
    """Per-core partial sum of (x - symlog(t))^2 over its slice of blocks."""
    c = pl.program_id(0)            # core-split axis (size 1 except on v7x)
    j = pl.program_id(1)            # reduction axis ("arbitrary")
    block_id = c * bps + j

    @pl.when(j == 0)
    def _init():
        acc_ref[...] = jnp.zeros_like(acc_ref)

    def _accumulate(valid_rows=None):
        x = x_ref[...].astype(jnp.float32)
        t = t_ref[...].astype(jnp.float32)
        d = x - _symlog(t)
        sq = d * d
        if valid_rows is not None:
            rid = lax.broadcasted_iota(jnp.int32, (block_rows, _LANES), 0)
            sq = jnp.where(rid < valid_rows, sq, 0.0)
        if block_rows % _SUBLANES == 0:
            # Reduce the block to an (8,128) partial with pure VPU adds; the
            # single cross-lane XLU reduce happens once per core at the end.
            acc_ref[...] += jnp.sum(
                sq.reshape(block_rows // _SUBLANES, _SUBLANES, _LANES), axis=0)
        else:
            # Tiny single-block inputs (rows < 8): one small sublane reduce.
            acc_ref[0:1, :] += jnp.sum(sq, axis=0, keepdims=True)

    last = num_blocks - 1
    if edge_valid_rows is not None:
        # Only the single partial edge block pays iota/compare/select.
        @pl.when(block_id == last)
        def _edge():
            _accumulate(edge_valid_rows)
        bulk_cond = block_id < last
    elif has_dup:
        # Duplicated clamped block on the second core split: skip it entirely.
        bulk_cond = block_id < num_blocks
    else:
        bulk_cond = None

    if bulk_cond is None:
        _accumulate()
    else:
        @pl.when(bulk_cond)
        def _bulk():
            _accumulate()

    @pl.when(j == pl.num_programs(1) - 1)
    def _finalize():
        out_ref[0, 0] = jnp.sum(acc_ref[...])    # one XLU reduce per core


def _sqerr_kernel(x_ref, t_ref, o_ref):
    """Elementwise (x - symlog(t))^2 for reduction='none'."""
    x = x_ref[...].astype(jnp.float32)
    t = t_ref[...].astype(jnp.float32)
    d = x - _symlog(t)
    o_ref[...] = (d * d).astype(o_ref.dtype)


def _to_rows(a):
    """(rows, 128) view of `a` in its native dtype, plus the true element count.

    For element counts divisible by 128 this is a free reshape (no copy, no
    pad); ragged row counts are handled downstream as partial edge blocks.
    """
    flat = a.reshape(-1)
    n = flat.shape[0]
    pad = (-n) % _LANES
    if pad:
        # TODO(synk): 128-unaligned element counts still pay one O(n) pad copy;
        # a fully copy-free path needs 1-D blocks plus an in-kernel
        # (K,) -> (K//128, 128) relayout, which is not portable across Mosaic
        # reshape support, so it is intentionally not used here.
        flat = jnp.pad(flat, (0, pad))
    return flat.reshape(-1, _LANES), n


def _pick_block_rows(rows: int, itemsize: int) -> int:
    """Block rows targeting ~2 MiB per input per grid step (dtype-scaled)."""
    cap = max(_SUBLANES,
              (_TARGET_BLOCK_BYTES // (_LANES * itemsize))
              // _SUBLANES * _SUBLANES)
    if rows >= _SUBLANES:
        return min(cap, (rows // _SUBLANES) * _SUBLANES)
    return rows             # tiny input: one block equal to the full dim


@functools.partial(jax.jit, static_argnames=("reduction",))
def symlog_loss(inp, tgt, reduction: str = "mean"):
    if inp.shape != tgt.shape:
        raise ValueError("input/target shapes must match")
    if reduction not in ("mean", "sum", "none"):
        raise ValueError(f"unsupported reduction: {reduction}")

    out_dtype = jnp.result_type(inp.dtype, tgt.dtype)
    x2, n = _to_rows(inp)
    t2, _ = _to_rows(tgt)
    rows = x2.shape[0]
    itemsize = max(jnp.dtype(inp.dtype).itemsize, jnp.dtype(tgt.dtype).itemsize)
    block_rows = _pick_block_rows(rows, itemsize)
    num_blocks = pl.cdiv(rows, block_rows)

    if reduction == "none":
        sq = pl.pallas_call(
            _sqerr_kernel,
            out_shape=jax.ShapeDtypeStruct((rows, _LANES), out_dtype),
            grid=(num_blocks,),
            in_specs=[pl.BlockSpec((block_rows, _LANES), lambda i: (i, 0)),
                      pl.BlockSpec((block_rows, _LANES), lambda i: (i, 0))],
            out_specs=pl.BlockSpec((block_rows, _LANES), lambda i: (i, 0)),
            compiler_params=pltpu.CompilerParams(
                dimension_semantics=("parallel",)),
        )(x2, t2)
        if rows * _LANES == n:
            return sq.reshape(inp.shape)          # free: no extra HBM pass
        return sq.reshape(-1)[:n].reshape(inp.shape)

    # 'mean' / 'sum': fused sum-of-squared-errors.
    num_splits = 2 if (_dual_tensorcore() and num_blocks >= 2) else 1
    bps = pl.cdiv(num_blocks, num_splits)          # blocks per core split
    has_dup = num_splits * bps != num_blocks       # second split re-reads one
    edge_valid = rows - (num_blocks - 1) * block_rows
    edge_valid_rows = None if edge_valid == block_rows else edge_valid

    if has_dup:
        def in_map(c, j):
            # Clamp so the split with fewer real blocks re-reads the last one;
            # its contribution is skipped inside the kernel.
            return (jnp.minimum(c * bps + j, num_blocks - 1), 0)
    else:
        def in_map(c, j):
            return (c * bps + j, 0)

    if num_splits == 2:
        # TODO(synk): confirm with an xprof trace on v7x that this axis really
        # shards across both TensorCores; otherwise switch to pl.core_map over
        # pltpu.create_tensorcore_mesh.
        semantics = (pltpu.CORE_PARALLEL, pltpu.ARBITRARY)
    else:
        semantics = ("parallel", "arbitrary")

    kernel = functools.partial(
        _sse_kernel, block_rows=block_rows, bps=bps, num_blocks=num_blocks,
        edge_valid_rows=edge_valid_rows, has_dup=has_dup)

    partials = pl.pallas_call(
        kernel,
        out_shape=jax.ShapeDtypeStruct((num_splits, 1), jnp.float32),
        grid=(num_splits, bps),
        in_specs=[pl.BlockSpec((block_rows, _LANES), in_map),
                  pl.BlockSpec((block_rows, _LANES), in_map)],
        out_specs=pl.BlockSpec((1, 1), lambda c, j: (c, 0),
                               memory_space=pltpu.SMEM),
        scratch_shapes=[pltpu.VMEM((_SUBLANES, _LANES), jnp.float32)],
        compiler_params=pltpu.CompilerParams(dimension_semantics=semantics),
    )(x2, t2)

    total = jnp.sum(partials)
    if reduction == "mean":
        total = total / jnp.float32(n)
    return total.astype(out_dtype)


def _reference(inp, tgt, reduction="mean"):
    inp = inp.astype(jnp.float32)
    tgt = tgt.astype(jnp.float32)
    sym = jnp.sign(tgt) * jnp.log(jnp.abs(tgt) + 1.0)
    se = (inp - sym) ** 2
    if reduction == "mean":
        return jnp.mean(se)
    if reduction == "sum":
        return jnp.sum(se)
    return se


def _check(shape, dtype, rtol, atol):
    key = jax.random.PRNGKey(0)
    k1, k2 = jax.random.split(key)
    x = jax.random.normal(k1, shape, dtype=jnp.float32).astype(dtype)
    t = (5.0 * jax.random.normal(k2, shape, dtype=jnp.float32)).astype(dtype)

    out_mean = jax.block_until_ready(symlog_loss(x, t, reduction="mean"))
    out_sum = jax.block_until_ready(symlog_loss(x, t, reduction="sum"))
    out_none = jax.block_until_ready(symlog_loss(x, t, reduction="none"))

    ref_mean = _reference(x, t, "mean")
    ref_sum = _reference(x, t, "sum")
    ref_none = _reference(x, t, "none")

    assert out_none.shape == shape and out_none.dtype == jnp.result_type(x, t), \
        (shape, dtype)
    assert jnp.allclose(out_mean, ref_mean, rtol=rtol, atol=atol), \
        (shape, dtype, out_mean, ref_mean)
    assert jnp.allclose(out_sum, ref_sum, rtol=rtol, atol=atol * 10.0), \
        (shape, dtype, out_sum, ref_sum)
    assert jnp.allclose(out_none, ref_none, rtol=rtol, atol=atol), (shape, dtype)


if __name__ == "__main__":
    # Small, 128-aligned: single block, fully copy-free fast path.
    _check((2, 4, 16, 16), jnp.float32, rtol=1e-5, atol=1e-5)
    # 128-unaligned element count (pad fallback + masked partial edge block).
    _check((3, 5, 7, 11), jnp.float32, rtol=1e-5, atol=1e-5)
    # Tiny input (rows < 8 accumulate branch).
    _check((3, 17), jnp.float32, rtol=1e-5, atol=1e-5)
    # 128-aligned, multi-block with a ragged (row-masked) edge block, no pad.
    _check((640, 1024), jnp.float32, rtol=1e-4, atol=1e-4)
    # 128-unaligned, multi-block.
    _check((513, 1027), jnp.float32, rtol=1e-4, atol=1e-4)
    # bf16 inputs: native-dtype DMA, bf16 result dtype, f32 in-register math.
    _check((2, 4, 16, 16), jnp.bfloat16, rtol=5e-2, atol=5e-2)

    print("KERNEL_OK")
</pallas_src>

<mosaic_0001>
module attributes {stable_mosaic.version = 11 : i64} {
  func.func @_sse_kernel(%arg0: i32, %arg1: i32, %arg2: memref<16x128xf32, #tpu.memory_space<vmem>>, %arg3: memref<16x128xf32, #tpu.memory_space<vmem>>, %arg4: memref<1x1xf32, #tpu.memory_space<smem>>, %arg5: memref<8x128xf32, #tpu.memory_space<vmem>>) attributes {dimension_semantics = [#tpu.dimension_semantics<parallel>, #tpu.dimension_semantics<arbitrary>], iteration_bounds = array<i64: 1, 1>, scalar_prefetch = 0 : i64, scratch_operands = 1 : i64, tpu.core_type = #tpu.core_type<tc>, window_params = [{transform_indices = @transform_0, window_bounds = array<i64: 16, 128>}, {transform_indices = @transform_1, window_bounds = array<i64: 16, 128>}, {transform_indices = @transform_2, window_bounds = array<i64: 1, 1>}]} {
    %c0_i32 = arith.constant 0 : i32
    %0 = arith.cmpi eq, %arg1, %c0_i32 : i32
    %1 = arith.extui %0 : i1 to i32
    %c0_i32_0 = arith.constant 0 : i32
    %2 = arith.cmpi ne, %1, %c0_i32_0 : i32
    scf.if %2 {
      %cst_10 = arith.constant 0.000000e+00 : f32
      %23 = vector.broadcast %cst_10 : f32 to vector<8x128xf32>
      %c0_11 = arith.constant 0 : index
      %c0_12 = arith.constant 0 : index
      %24 = vector.load %arg5[%c0_11, %c0_12] : memref<8x128xf32, #tpu.memory_space<vmem>>, vector<8x128xf32>
      tpu.vector_store %arg5[%c0_11, %c0_12], %23 {strides = array<i32>} : memref<8x128xf32, #tpu.memory_space<vmem>>, vector<8x128xf32>,
    } else {
    }
    %c0 = arith.constant 0 : index
    %c0_1 = arith.constant 0 : index
    %3 = vector.load %arg2[%c0, %c0_1] : memref<16x128xf32, #tpu.memory_space<vmem>>, vector<16x128xf32>
    %c0_2 = arith.constant 0 : index
    %c0_3 = arith.constant 0 : index
    %4 = vector.load %arg3[%c0_2, %c0_3] : memref<16x128xf32, #tpu.memory_space<vmem>>, vector<16x128xf32>
    %5 = math.absf %4 : vector<16x128xf32>
    %6 = math.log1p %5 : vector<16x128xf32>
    %7 = tpu.bitcast %4 : vector<16x128xf32> -> vector<16x128xi32>
    %c-2147483648_i32 = arith.constant -2147483648 : i32
    %8 = vector.broadcast %c-2147483648_i32 : i32 to vector<16x128xi32>
    %9 = arith.andi %7, %8 : vector<16x128xi32>
    %10 = tpu.bitcast %6 : vector<16x128xf32> -> vector<16x128xi32>
    %11 = arith.ori %10, %9 : vector<16x128xi32>
    %12 = tpu.bitcast %11 : vector<16x128xi32> -> vector<16x128xf32>
    %13 = arith.subf %3, %12 : vector<16x128xf32>
    %14 = arith.mulf %13, %13 : vector<16x128xf32>
    %c0_4 = arith.constant 0 : index
    %c0_5 = arith.constant 0 : index
    %15 = vector.load %arg5[%c0_4, %c0_5] : memref<8x128xf32, #tpu.memory_space<vmem>>, vector<8x128xf32>
    %16 = vector.shape_cast %14 : vector<16x128xf32> to vector<2x8x128xf32>
    %cst = arith.constant dense<0.000000e+00> : vector<8x128xf32>
    %17 = vector.multi_reduction <add>, %16, %cst [0] : vector<2x8x128xf32> to vector<8x128xf32>
    %18 = arith.addf %15, %17 : vector<8x128xf32>
    %c0_6 = arith.constant 0 : index
    %c0_7 = arith.constant 0 : index
    %19 = vector.load %arg5[%c0_6, %c0_7] : memref<8x128xf32, #tpu.memory_space<vmem>>, vector<8x128xf32>
    tpu.vector_store %arg5[%c0_6, %c0_7], %18 {strides = array<i32>} : memref<8x128xf32, #tpu.memory_space<vmem>>, vector<8x128xf32>,
    %c0_i32_8 = arith.constant 0 : i32
    %20 = arith.cmpi eq, %arg1, %c0_i32_8 : i32
    %21 = arith.extui %20 : i1 to i32
    %c0_i32_9 = arith.constant 0 : i32
    %22 = arith.cmpi ne, %21, %c0_i32_9 : i32
    scf.if %22 {
      %c0_10 = arith.constant 0 : index
      %c0_11 = arith.constant 0 : index
      %23 = vector.load %arg5[%c0_10, %c0_11] : memref<8x128xf32, #tpu.memory_space<vmem>>, vector<8x128xf32>
      %24 = vector.shape_cast %23 : vector<8x128xf32> to vector<1x8x128xf32>
      %cst_12 = arith.constant dense<0.000000e+00> : vector<1xf32>
      %25 = vector.multi_reduction <add>, %24, %cst_12 [1, 2] : vector<1x8x128xf32> to vector<1xf32>
      %26 = vector.shape_cast %25 : vector<1xf32> to vector<1x1x1xf32>
      %27 = vector.extract %26[0, 0, 0] : f32 from vector<1x1x1xf32>
      %c0_13 = arith.constant 0 : index
      %c0_14 = arith.constant 0 : index
      %28 = memref.load %arg4[%c0_13, %c0_14] : memref<1x1xf32, #tpu.memory_space<smem>>
      memref.store %27, %arg4[%c0_13, %c0_14] : memref<1x1xf32, #tpu.memory_space<smem>>
    } else {
    }
    return
  }
  func.func @transform_0(%arg0: i32, %arg1: i32) -> (i32, i32) {
    %c1_i32 = arith.constant 1 : i32
    %0 = arith.muli %arg0, %c1_i32 : i32
    %1 = arith.addi %0, %arg1 : i32
    %c0_i32 = arith.constant 0 : i32
    %c0_i32_0 = arith.constant 0 : i32
    return %1, %c0_i32 : i32, i32
  }
  func.func @transform_1(%arg0: i32, %arg1: i32) -> (i32, i32) {
    %c1_i32 = arith.constant 1 : i32
    %0 = arith.muli %arg0, %c1_i32 : i32
    %1 = arith.addi %0, %arg1 : i32
    %c0_i32 = arith.constant 0 : i32
    %c0_i32_0 = arith.constant 0 : i32
    return %1, %c0_i32 : i32, i32
  }
  func.func @transform_2(%arg0: i32, %arg1: i32) -> (i32, i32) {
    %c0_i32 = arith.constant 0 : i32
    %c0_i32_0 = arith.constant 0 : i32
    return %arg0, %c0_i32 : i32, i32
  }
}

</mosaic_0001>

<llo_original>
// kernel: symlog_loss.1
$region0: #{symlog_loss.1}
  #allocation0 [shape = 'u32[]', space=smem, size = 0x4, offset = 0x4, fixed_abs, tag = 'smem constant byte address 0x4 - core index']
  #allocation1 [shape = 'u32[144,128]{1,0:T(1,128)}', space=vmem, size = 0x12000, scoped, tag = 'internal scratch']
  #allocation2 [shape = 'f32[8,128]{1,0:T(8,128)}', space=vmem, size = 0x1000, scoped, tag = 'scratch operand']
  %s0 = inlined_call_operand.vmem [shape: f32[16,128], index: 0, kind: input, shape index: {}]
  %s1 = inlined_call_operand.vmem [shape: f32[16,128], index: 1, kind: input, shape index: {}]
  %s2 = inlined_call_operand.hbm [shape: f32[1,1], index: 2, kind: output, shape index: {}]
  %s3 = sld [smem:[#allocation0]]
  $region26: #{symlog_loss.1} parent=0
    _
  %s5 = ssub.s32 1, %s3
  %s6 = scalar_select 0, %s5, %s3
  $region1: #{symlog_loss.1} parent=0
    #allocation3 [shape = 'u8[512]{0}', space=smem, size = 0x200, scoped, tag = 'output window, operand 0, single buffered']
    #allocation4 [shape = 's32[1]{0}', space=sflag, size = 0x4, scoped, tag = 'scoped memory for symlog_loss.1']
    %7 = vsyncpa [#allocation4], 0
    // Predicated region
    $region2: #{symlog_loss.1} parent=1 // pred_check
      _
    $region3: #{symlog_loss.1} parent=1 // pred_check_branch
      %9 = sbr.rel (0) target = $region5
    $region4: #{symlog_loss.1} parent=1 // pred_region
      %s10 = sadd.s32 0, 0
      %s11 = smul.u32 2, %s10
      %p12 = scmp.lt.s32.totalorder %s11, 1
      %s13 = scalar_select %p12, %s11, 1
      %s14 = smul.addr %s13, 8
      %s15 = scalar_lea.vmem %s0, %s14
      %s16 = sadd.s32 0, 0
      %s17 = smul.u32 2, %s16
    $region5: #{symlog_loss.1} parent=1 // pred_fallthru
      _
    // Predicated region
    $region6: #{symlog_loss.1} parent=1 // pred_check
      _
    $region7: #{symlog_loss.1} parent=1 // pred_check_branch
      %19 = sbr.rel (0) target = $region9
    $region8: #{symlog_loss.1} parent=1 // pred_region
      %s20 = sadd.s32 0, 0
      %s21 = smul.u32 2, %s20
      %p22 = scmp.lt.s32.totalorder %s21, 1
      %s23 = scalar_select %p22, %s21, 1
      %s24 = smul.addr %s23, 8
      %s25 = scalar_lea.vmem %s1, %s24
      %s26 = sadd.s32 0, 0
      %s27 = smul.u32 2, %s26
    $region9: #{symlog_loss.1} parent=1 // pred_fallthru
      _
    %s28 = sadd.s32 0, 0
    %s29 = smul.u32 2, %s28
    %p30 = scmp.lt.s32.totalorder %s29, 1
    %s31 = scalar_select %p30, %s29, 1
    %s32 = smul.addr %s31, 8
    %s33 = scalar_lea.vmem %s0, %s32
    %s34 = sadd.s32 0, 0
    %s35 = smul.u32 2, %s34
    %p36 = scmp.lt.s32.totalorder %s35, 1
    %s37 = scalar_select %p36, %s35, 1
    %s38 = smul.addr %s37, 8
    %s39 = scalar_lea.vmem %s1, %s38
    %s40 = sadd.s32 0, 0
    %s41 = smul.u32 2, %s40
    %p42 = scmp.lt.s32.totalorder %s41, 1
    %s43 = scalar_select %p42, %s41, 1
    %s44 = smul.addr %s43, 8
    %s45 = scalar_lea.vmem %s0, %s44
    %s46 = sadd.s32 0, 0
    %s47 = smul.u32 2, %s46
    %s48 = sadd.s32 0, 0
    %s49 = smul.u32 2, %s48
    %p50 = scmp.lt.s32.totalorder %s49, 1
    %s51 = scalar_select %p50, %s49, 1
    %s52 = smul.addr %s51, 8
    %s53 = scalar_lea.vmem %s1, %s52
    %s54 = sadd.s32 0, 0
    %s55 = smul.u32 2, %s54
    %p56 = scmp.eq.s32.totalorder 0, 0
    // Predicated region
    $region10: #{symlog_loss.1} parent=1 // pred_check
      %p57 = pneg %p56
    $region11: #{symlog_loss.1} parent=1 // pred_check_branch
      %59 = sbr.rel (%p57) target = $region13
    $region12: #{symlog_loss.1} parent=1 // pred_region
      %60 = vst [vmem:[#allocation2] sm:$0xff] 0.0
    $region13: #{symlog_loss.1} parent=1 // pred_fallthru
      _
    %v61 = vld [vmem:[%s45] sm:$0xff]
    %v62 = vld [vmem:[%s45 + $0x8] sm:$0xff]
    %v63 = vld [vmem:[%s53] sm:$0xff]
    %v64 = vld [vmem:[%s53 + $0x8] sm:$0xff]
    %v65 = vand.u32 2147483647, %v63
    %v66 = vand.u32 2147483647, %v64
    %v67 = vadd.f32 %v65, 1.0
    %v68 = vlog2.pop %v67
    %v69 = vmul.f32 %v68, 0.6931472
    %v70 = vmul.f32 -0.5, %v65
    %v71 = vadd.f32 %v70, 1.0
    %v72 = vmul.f32 %v71, %v65
    %v73 = vand.u32 2147483647, %v65
    %vm74 = vcmp.lt.f32.partialorder %v73, 0.0004427343
    %v75 = vsel %vm74, %v72, %v69
    %v76 = vadd.f32 %v66, 1.0
    %v77 = vlog2.pop %v76
    %v78 = vmul.f32 %v77, 0.6931472
    %v79 = vmul.f32 -0.5, %v66
    %v80 = vadd.f32 %v79, 1.0
    %v81 = vmul.f32 %v80, %v66
    %v82 = vand.u32 2147483647, %v66
    %vm83 = vcmp.lt.f32.partialorder %v82, 0.0004427343
    %v84 = vsel %vm83, %v81, %v78
    %v87 = vand.u32 %v63, 2147483648
    %v88 = vand.u32 %v64, 2147483648
    %v91 = vor.u32 %v75, %v87
    %v92 = vor.u32 %v84, %v88
    %v95 = vsub.f32 %v61, %v91
    %v96 = vsub.f32 %v62, %v92
    %v97 = vmul.f32 %v95, %v95
    %v98 = vmul.f32 %v96, %v96
    %v99 = vld [vmem:[#allocation2] sm:$0xff]
    %v100 = vadd.f32 %v97, %v98
    %v101 = vadd.f32 %v99, %v100
    %102 = vst [vmem:[#allocation2] sm:$0xff] %v101
    // Predicated region
    $region14: #{symlog_loss.1} parent=1 // pred_check
      %p103 = pneg %p56
    $region15: #{symlog_loss.1} parent=1 // pred_check_branch
      %105 = sbr.rel (%p103) target = $region17
    $region16: #{symlog_loss.1} parent=1 // pred_region
      %v106 = vld [vmem:[#allocation2] sm:$0xff]
      %107 = vadd.xlane.f32.xlu0 %v106
      %v108 = vpop.xlane.xlu0 %107
      %v109 = vrot.slane %v108, 4
      %v110 = vadd.f32 %v108, %v109
      %v111 = vrot.slane %v110, 2
      %v112 = vadd.f32 %v110, %v111
      %v113 = vrot.slane %v112, 1
      %v114 = vadd.f32 %v112, %v113
      %s115 = vtos %v114
      %s116 = scalar_lea.smem [#allocation3], 0
      %117 = sst [smem:[%s116]] %s115
    $region17: #{symlog_loss.1} parent=1 // pred_fallthru
      _
    // Predicated region
    $region18: #{symlog_loss.1} parent=1 // pred_check
      _
    $region19: #{symlog_loss.1} parent=1 // pred_check_branch
      %119 = sbr.rel (0) target = $region21
    $region20: #{symlog_loss.1} parent=1 // pred_region
      %s121 = ssub.s32 16, 16
      %122 = vsyncadd [#allocation4], %s121
      %125 = dma.smem_to_hbm [#allocation3], 16, %s2, [#allocation4]
    $region21: #{symlog_loss.1} parent=1 // pred_fallthru
      _
    // Predicated region
    $region22: #{symlog_loss.1} parent=1 // pred_check
      _
    $region23: #{symlog_loss.1} parent=1 // pred_check_branch
      %127 = sbr.rel (0) target = $region25
    $region24: #{symlog_loss.1} parent=1 // pred_region
      %128 = dma.done [#allocation4], 16
    $region25: #{symlog_loss.1} parent=1 // pred_fallthru
      _
    %129 = sfence
    %130 = vsyncpa [#allocation4], 1

</llo_original>
